<compile_context>
chip_gen: v7x
topology: tpu7x:2x2x1
jax: 0.10.0
libtpu: 0.0.40
codegen_flags: <defaults>
</compile_context>

<pallas_src>
from functools import partial

import jax
import jax.numpy as jnp
from jax.experimental import pallas as pl
from jax.experimental.pallas import tpu as pltpu


# --------------------------------------------------------------------------
# Tiling helpers
# --------------------------------------------------------------------------

def _round_up(x, m):
    return ((x + m - 1) // m) * m


def _largest_divisor_tile(hwp, cap):
    """Largest multiple of 128 that divides hwp (hwp % 128 == 0) and is <= cap."""
    t = min(hwp, max(128, (cap // 128) * 128))
    while hwp % t:
        t -= 128
    return t


def _plan_tiling(hw, batch, bytes_per_col, *, block_budget=24 << 20):
    """Pick (HWp, T): padded spatial extent and lane-tile size.

    bytes_per_col: VMEM bytes per lane column for double-buffered in+out blocks.
    Budget of ~24 MiB for the blocks keeps comfortable headroom on v7x (64 MiB
    physical VMEM per TC) while staying well past the ~1024-lane pipelining
    sweet spot measured on v6e.
    """
    t_budget = (block_budget // max(bytes_per_col, 1)) // 128 * 128
    t_budget = max(128, min(8192, t_budget))

    hwp = _round_up(hw, 128)
    t = _largest_divisor_tile(hwp, t_budget)

    # Avoid the degenerate T=128 fallback for awkward H*W (e.g. prime HWp/128):
    # pad HW up to a multiple of a good tile instead.
    good = min(t_budget, hwp, 1024)
    if t < good:
        t = good
        hwp = _round_up(hw, t)

    # v7x has 2 TensorCores per chip: make sure the grid has >= 2 points so
    # megacore sharding can engage.  Only split if the halved tile stays at a
    # healthy lane width (>= 512 lanes keeps ~85% of the HBM roofline).
    if batch * (hwp // t) < 2 and t >= 1024:
        t2 = _largest_divisor_tile(hwp, t // 2)
        if t2 >= 512:
            t = t2
    return hwp, t


def _vmem_limit(needed_bytes):
    # Explicit scoped-VMEM limit: raise v5e's 16 MiB default when needed, but
    # never request more than ~48 MiB (headroom on v7x's 64 MiB physical VMEM).
    return int(min(48 << 20, max(16 << 20, 2 * needed_bytes)))


# --------------------------------------------------------------------------
# Pallas kernels
# --------------------------------------------------------------------------

def _layernorm_kernel(x_ref, g_ref, o_ref, *, eps):
    # Block: (1, C, T) — C on sublanes (reduction axis), T (slab of H*W) on the
    # 128-lane axis.  Pure VPU + sublane-XLU work riding under the DMA.
    x = x_ref[...].astype(jnp.float32)
    mean = jnp.mean(x, axis=1, keepdims=True)
    xc = x - mean                                     # computed once, reused
    var = jnp.mean(xc * xc, axis=1, keepdims=True)    # unbiased=False
    y = xc * jax.lax.rsqrt(var + eps) * g_ref[...]
    o_ref[...] = y.astype(o_ref.dtype)


def _prenorm_conv1x1_kernel(x_ref, w_ref, b_ref, o_ref, *, eps):
    # Fused PreNorm(dim, Conv2d(dim, cout, 1)):
    #   LayerNorm (f32, VPU/XLU) -> MXU matmul (f32 acc) -> fused bias.
    # g is folded into w outside the kernel, so no per-step g multiply here.
    x = x_ref[...].astype(jnp.float32)                # (1, C, T)
    mean = jnp.mean(x, axis=1, keepdims=True)
    xc = x - mean
    var = jnp.mean(xc * xc, axis=1, keepdims=True)
    xn = xc * jax.lax.rsqrt(var + eps)                # (1, C, T) f32
    acc = jnp.dot(w_ref[...],                         # (Cout, C)  (g folded in)
                  xn[0].astype(w_ref.dtype),          # (C, T)
                  preferred_element_type=jnp.float32) # (Cout, T) f32
    o_ref[0] = (acc + b_ref[...]).astype(o_ref.dtype)


# --------------------------------------------------------------------------
# Wrappers
# --------------------------------------------------------------------------

def layer_norm_nchw(x, g, eps=None):
    """Channel-wise (dim=1) LayerNorm of an NCHW tensor — the `norm` of PreNorm."""
    B, C, H, W = x.shape
    if eps is None:
        eps = 1e-5 if x.dtype == jnp.float32 else 1e-3   # matches the PyTorch spec
    HW = H * W
    itm = jnp.dtype(x.dtype).itemsize
    HWp, T = _plan_tiling(HW, B, bytes_per_col=2 * (C * itm + C * itm))

    x3 = x.reshape(B, C, HW)
    if HWp != HW:
        # Only taken for awkward H*W; at demo sizes this is a no-op.
        x3 = jnp.pad(x3, ((0, 0), (0, 0), (0, HWp - HW)))
    g3 = jnp.asarray(g, jnp.float32).reshape(1, C, 1)

    needed = 2 * (C * T * itm + C * T * itm) + g3.size * 4

    out = pl.pallas_call(
        partial(_layernorm_kernel, eps=eps),
        out_shape=jax.ShapeDtypeStruct((B, C, HWp), x.dtype),
        grid=(B, HWp // T),
        in_specs=[pl.BlockSpec((1, C, T), lambda bi, si: (bi, 0, si)),
                  pl.BlockSpec((1, C, 1), lambda bi, si: (0, 0, 0))],
        out_specs=pl.BlockSpec((1, C, T), lambda bi, si: (bi, 0, si)),
        compiler_params=pltpu.CompilerParams(
            dimension_semantics=("parallel", "parallel"),
            vmem_limit_bytes=_vmem_limit(needed)),
    )(x3, g3)

    if HWp != HW:
        out = out[:, :, :HW]
    return out.reshape(B, C, H, W)


def pre_norm(x, g, fn, eps=None):
    """PreNorm.forward(x) = fn(LayerNorm(x)); the LayerNorm is a Pallas kernel."""
    # TODO(synk): the wrapped `fn` is an arbitrary nn.Module in the spec; it is
    # applied as a plain callable here.  The common 1x1-conv (to_qkv) case is
    # fully fused in pre_norm_conv1x1 below.
    return fn(layer_norm_nchw(x, g, eps))


def pre_norm_conv1x1(x, g, w, b=None, eps=None,
                     out_dtype=jnp.bfloat16, precise=False):
    """Fused PreNorm(dim, Conv2d(dim, cout, kernel_size=1)) forward.

    x: (B, C, H, W), g: (1, C, 1, 1), w: (Cout, C, 1, 1), b: (Cout,) or None.
    out_dtype defaults to bf16 (halves the dominant HBM writeback; downstream
    attention consumes bf16).  precise=True keeps the matmul operands in f32.
    """
    B, C, H, W = x.shape
    Cout = w.shape[0]
    if eps is None:
        eps = 1e-5 if x.dtype == jnp.float32 else 1e-3
    HW = H * W
    in_itm = jnp.dtype(x.dtype).itemsize
    out_itm = jnp.dtype(out_dtype).itemsize
    HWp, T = _plan_tiling(HW, B, bytes_per_col=2 * (C * in_itm + Cout * out_itm))

    x3 = x.reshape(B, C, HW)
    if HWp != HW:
        x3 = jnp.pad(x3, ((0, 0), (0, 0), (0, HWp - HW)))

    # Fold g into the weight: W @ (g ⊙ x̂) = (W · diag(g)) @ x̂.  Touches only the
    # tiny (Cout, C) weight once per call — not the activations.
    mm_dtype = jnp.float32 if precise else jnp.bfloat16
    w2 = (jnp.asarray(w, jnp.float32).reshape(Cout, C)
          * jnp.asarray(g, jnp.float32).reshape(1, C)).astype(mm_dtype)
    b1 = jnp.zeros((Cout,), jnp.float32) if b is None else jnp.asarray(b, jnp.float32)
    b2 = b1.reshape(Cout, 1)

    needed = (2 * (C * T * in_itm + Cout * T * out_itm)
              + w2.size * w2.dtype.itemsize + b2.size * 4)

    # TODO(synk): for very large Cout on v7x, add a Cout grid axis (tile w and
    # the output over Cout) instead of shrinking T below the ~1024-lane sweet spot.
    out = pl.pallas_call(
        partial(_prenorm_conv1x1_kernel, eps=eps),
        out_shape=jax.ShapeDtypeStruct((B, Cout, HWp), out_dtype),
        grid=(B, HWp // T),
        in_specs=[pl.BlockSpec((1, C, T), lambda bi, si: (bi, 0, si)),
                  pl.BlockSpec((Cout, C), lambda bi, si: (0, 0)),
                  pl.BlockSpec((Cout, 1), lambda bi, si: (0, 0))],
        out_specs=pl.BlockSpec((1, Cout, T), lambda bi, si: (bi, 0, si)),
        compiler_params=pltpu.CompilerParams(
            dimension_semantics=("parallel", "parallel"),
            vmem_limit_bytes=_vmem_limit(needed)),
    )(x3, w2, b2)

    if HWp != HW:
        out = out[:, :, :HW]
    return out.reshape(B, Cout, H, W)


# --------------------------------------------------------------------------
# Plain-JAX references (for correctness checks only)
# --------------------------------------------------------------------------

def _layer_norm_ref(x, g, eps=1e-5):
    mean = jnp.mean(x, axis=1, keepdims=True)
    var = jnp.mean((x - mean) ** 2, axis=1, keepdims=True)
    return (x - mean) * jax.lax.rsqrt(var + eps) * g


def _conv1x1_ref(x, w, b):
    Cout, C = w.shape[0], w.shape[1]
    y = jnp.einsum('oc,bchw->bohw', w.reshape(Cout, C), x)
    return y + b[None, :, None, None]


# --------------------------------------------------------------------------
# Main
# --------------------------------------------------------------------------

if __name__ == "__main__":
    B, DIM, H, W = 2, 64, 16, 16
    HEADS, DIM_HEAD = 4, 32
    HIDDEN = HEADS * DIM_HEAD * 3          # to_qkv channels in the Unet usage

    key = jax.random.PRNGKey(0)
    kx, kg, kw, kb = jax.random.split(key, 4)
    x = jax.random.normal(kx, (B, DIM, H, W), jnp.float32)
    g = 1.0 + 0.1 * jax.random.normal(kg, (1, DIM, 1, 1), jnp.float32)
    w_qkv = 0.05 * jax.random.normal(kw, (HIDDEN, DIM, 1, 1), jnp.float32)
    b_qkv = 0.01 * jax.random.normal(kb, (HIDDEN,), jnp.float32)

    # Case 1: PreNorm with a generic fn (identity) -> standalone LayerNorm kernel.
    fn_identity = lambda y: y
    out1 = jax.block_until_ready(pre_norm(x, g, fn_identity))
    ref1 = fn_identity(_layer_norm_ref(x, g, 1e-5))
    assert out1.shape == (B, DIM, H, W), out1.shape
    err1 = float(jnp.max(jnp.abs(out1 - ref1)))
    assert err1 < 1e-4, f"layernorm mismatch: {err1}"

    # Case 2: PreNorm wrapping a 1x1 conv (the to_qkv projection), fully fused
    # (LayerNorm + bf16 MXU matmul + bias, g folded into w, bf16 writeback).
    out2 = jax.block_until_ready(pre_norm_conv1x1(x, g, w_qkv, b_qkv))
    ref2 = _conv1x1_ref(_layer_norm_ref(x, g, 1e-5), w_qkv, b_qkv)
    assert out2.shape == (B, HIDDEN, H, W), out2.shape
    assert out2.dtype == jnp.bfloat16, out2.dtype
    err2 = float(jnp.max(jnp.abs(out2.astype(jnp.float32) - ref2)))
    assert err2 < 5e-2, f"fused prenorm+conv1x1 mismatch (bf16 path): {err2}"

    print("KERNEL_OK")
</pallas_src>

<mosaic_0001>
module attributes {stable_mosaic.version = 11 : i64} {
  func.func @_layernorm_kernel(%arg0: i32, %arg1: i32, %arg2: memref<1x64x256xf32, #tpu.memory_space<vmem>>, %arg3: memref<1x64x1xf32, #tpu.memory_space<vmem>>, %arg4: memref<1x64x256xf32, #tpu.memory_space<vmem>>) attributes {dimension_semantics = [#tpu.dimension_semantics<parallel>, #tpu.dimension_semantics<parallel>], iteration_bounds = array<i64: 2, 1>, scalar_prefetch = 0 : i64, scratch_operands = 0 : i64, tpu.core_type = #tpu.core_type<tc>, window_params = [{transform_indices = @transform_0, window_bounds = array<i64: 1, 64, 256>}, {pipeline_mode = #tpu.pipeline_mode<synchronous>, transform_indices = @transform_1, window_bounds = array<i64: 1, 64, 1>}, {transform_indices = @transform_2, window_bounds = array<i64: 1, 64, 256>}]} {
    %c0 = arith.constant 0 : index
    %c0_0 = arith.constant 0 : index
    %c0_1 = arith.constant 0 : index
    %0 = vector.load %arg2[%c0, %c0_0, %c0_1] : memref<1x64x256xf32, #tpu.memory_space<vmem>>, vector<1x64x256xf32>
    %cst = arith.constant dense<0.000000e+00> : vector<1x256xf32>
    %1 = vector.multi_reduction <add>, %0, %cst [1] : vector<1x64x256xf32> to vector<1x256xf32>
    %2 = vector.shape_cast %1 : vector<1x256xf32> to vector<1x1x256xf32>
    %cst_2 = arith.constant 6.400000e+01 : f32
    %3 = vector.broadcast %cst_2 : f32 to vector<1x1x256xf32>
    %4 = arith.divf %2, %3 : vector<1x1x256xf32>
    %5 = vector.broadcast %4 : vector<1x1x256xf32> to vector<1x64x256xf32>
    %6 = arith.subf %0, %5 : vector<1x64x256xf32>
    %7 = arith.mulf %6, %6 : vector<1x64x256xf32>
    %cst_3 = arith.constant dense<0.000000e+00> : vector<1x256xf32>
    %8 = vector.multi_reduction <add>, %7, %cst_3 [1] : vector<1x64x256xf32> to vector<1x256xf32>
    %9 = vector.shape_cast %8 : vector<1x256xf32> to vector<1x1x256xf32>
    %cst_4 = arith.constant 6.400000e+01 : f32
    %10 = vector.broadcast %cst_4 : f32 to vector<1x1x256xf32>
    %11 = arith.divf %9, %10 : vector<1x1x256xf32>
    %cst_5 = arith.constant 9.99999974E-6 : f32
    %12 = vector.broadcast %cst_5 : f32 to vector<1x1x256xf32>
    %13 = arith.addf %11, %12 : vector<1x1x256xf32>
    %14 = math.rsqrt %13 : vector<1x1x256xf32>
    %15 = vector.broadcast %14 : vector<1x1x256xf32> to vector<1x64x256xf32>
    %16 = arith.mulf %6, %15 : vector<1x64x256xf32>
    %c0_6 = arith.constant 0 : index
    %c0_7 = arith.constant 0 : index
    %c0_8 = arith.constant 0 : index
    %17 = vector.load %arg3[%c0_6, %c0_7, %c0_8] : memref<1x64x1xf32, #tpu.memory_space<vmem>>, vector<1x64x1xf32>
    %18 = vector.broadcast %17 : vector<1x64x1xf32> to vector<1x64x256xf32>
    %19 = arith.mulf %16, %18 : vector<1x64x256xf32>
    %c0_9 = arith.constant 0 : index
    %c0_10 = arith.constant 0 : index
    %c0_11 = arith.constant 0 : index
    %20 = vector.load %arg4[%c0_9, %c0_10, %c0_11] : memref<1x64x256xf32, #tpu.memory_space<vmem>>, vector<1x64x256xf32>
    tpu.vector_store %arg4[%c0_9, %c0_10, %c0_11], %19 {strides = array<i32>} : memref<1x64x256xf32, #tpu.memory_space<vmem>>, vector<1x64x256xf32>,
    return
  }
  func.func @transform_0(%arg0: i32, %arg1: i32) -> (i32, i32, i32) {
    %c0_i32 = arith.constant 0 : i32
    %c0_i32_0 = arith.constant 0 : i32
    return %arg0, %c0_i32, %arg1 : i32, i32, i32
  }
  func.func @transform_1(%arg0: i32, %arg1: i32) -> (i32, i32, i32) {
    %c0_i32 = arith.constant 0 : i32
    %c0_i32_0 = arith.constant 0 : i32
    %c0_i32_1 = arith.constant 0 : i32
    %c0_i32_2 = arith.constant 0 : i32
    return %c0_i32, %c0_i32_0, %c0_i32_1 : i32, i32, i32
  }
  func.func @transform_2(%arg0: i32, %arg1: i32) -> (i32, i32, i32) {
    %c0_i32 = arith.constant 0 : i32
    %c0_i32_0 = arith.constant 0 : i32
    return %arg0, %c0_i32, %arg1 : i32, i32, i32
  }
}

</mosaic_0001>

<llo_original>
// kernel: tpu_custom_call.1
$region0: #{tpu_custom_call.1}
  #allocation0 [shape = 'u32[]', space=smem, size = 0x4, offset = 0x4, fixed_abs, tag = 'smem constant byte address 0x4 - core index']
  #allocation1 [shape = 'u32[144,128]{1,0:T(1,128)}', space=vmem, size = 0x12000, scoped, tag = 'internal scratch']
  %s0 = inlined_call_operand.hbm [shape: f32[2,64,256], index: 0, kind: input, shape index: {}]
  %s1 = inlined_call_operand.vmem [shape: f32[1,64,1], index: 1, kind: input, shape index: {}]
  %s2 = inlined_call_operand.hbm [shape: f32[2,64,256], index: 2, kind: output, shape index: {}]
  %s3 = sld [smem:[#allocation0]]
  $region45: #{tpu_custom_call.1} parent=0
    _
  %s5 = ssub.s32 1, %s3
  %s6 = scalar_select 0, %s5, %s3
  $region1: #{tpu_custom_call.1} parent=0
    #allocation2 [shape = 'u8[131072]{0}', space=vmem, size = 0x20000, scoped, tag = 'input window, operand 0']
    #allocation3 [shape = 's32[2]{0}', space=sflag, size = 0x8, scoped, tag = 'scoped memory for tpu_custom_call.1']
    #allocation4 [shape = 's32[2]{0}', space=sflag, size = 0x8, scoped, tag = 'scoped memory for tpu_custom_call.1']
    #allocation5 [shape = 'u8[131072]{0}', space=vmem, size = 0x20000, scoped, tag = 'output window, operand 0']
    %7 = vsyncpa [#allocation3], 0
    %s8 = scalar_lea.sflag [#allocation3], 1
    %9 = vsyncpa %s8, 0
    %10 = vsyncpa [#allocation4], 0
    %s11 = scalar_lea.sflag [#allocation4], 1
    %12 = vsyncpa %s11, 0
    loop: start=0, step=1, limit=4
    $region2: #{tpu_custom_call.1} parent=1 // loop_pre_header
      _
    $region3: #{tpu_custom_call.1} parent=1 // loop_header
      %s14 = sphi 0, %s18
      %p15 = scmp.ge.s32.totalorder %s14, 4
      %s21 = sphi 0, %s33
      %s22 = sphi 0, %s29
      %s23 = sphi 0, %s21
      %s24 = sphi 0, %s22
      %s25 = sphi 0, %s23
      %s26 = sphi 0, %s24
      %s38 = sphi 0, %s40
      %s41 = sphi 0, %s38
      %s42 = sphi 0, %s41
      %s58 = sphi 0, %s42
      %s62 = sphi 0, %s62
      %s64 = sphi 0, %s62
      %s65 = sphi 0, %s64
      %s79 = sphi 0, %s65
      %s87 = sphi 0, %s89
      %s90 = sphi 0, %s87
      %s91 = sphi 0, %s90
      %s107 = sphi 0, %s91
    $region4: #{tpu_custom_call.1} parent=1 // loop_header_branch
      %17 = sbr.rel (%p15) target = $region8
    $region5: #{tpu_custom_call.1} parent=1 // loop_body
      %s19 = ssub.s32 %s14, 1
      %s20 = ssub.s32 %s14, 2
      %s27 = sadd.s32 1, %s22
      %p28 = scmp.ge.s32.totalorder %s27, 1
      %s29 = scalar_select %p28, 0, %s27
      %s30 = sadd.s32 1, %s21
      %s31 = scalar_select %p28, %s30, %s21
      %p32 = scmp.ge.s32.totalorder %s31, 2
      %s33 = scalar_select %p32, 0, %s31
      %s34 = ssub.s32 %s21, %s33
      %s35 = ssub.s32 %s22, %s29
      %s36 = sor.u32 %s34, %s35
      %p37 = scmp.eq.s32.totalorder %s36, 0
      %s39 = sadd.s32 %s38, 1
      %s40 = scalar_select %p37, %s38, %s39
      %p43 = pneg %p37
      %p44 = scmp.eq.s32.totalorder %s14, 1
      %p45 = por %p43, %p44
      %p46 = scmp.ne.s32.totalorder %s38, %s41
      %p47 = scmp.eq.s32.totalorder %s14, 0
      %p48 = por %p46, %p47
      %p49 = scmp.ne.s32.totalorder %s38, %s41
      %p50 = scmp.eq.s32.totalorder %s19, 1
      %p51 = por %p49, %p50
      %p52 = scmp.ne.s32.totalorder %s41, %s42
      %p53 = scmp.eq.s32.totalorder %s19, 0
      %p54 = por %p52, %p53
      %p55 = scmp.ne.s32.totalorder %s41, %s42
      %p56 = scmp.eq.s32.totalorder %s20, 1
      %p57 = por %p55, %p56
      %p59 = scmp.ne.s32.totalorder %s42, %s58
      %p60 = scmp.eq.s32.totalorder %s20, 0
      %p61 = por %p59, %p60
      %s63 = sadd.s32 %s62, 1
      %p66 = scmp.eq.s32.totalorder %s14, 1
      %p67 = scmp.ne.s32.totalorder %s62, %s64
      %p68 = scmp.eq.s32.totalorder %s14, 0
      %p69 = por %p67, %p68
      %p70 = scmp.ne.s32.totalorder %s62, %s64
      %p71 = scmp.eq.s32.totalorder %s19, 1
      %p72 = por %p70, %p71
      %p73 = scmp.ne.s32.totalorder %s64, %s65
      %p74 = scmp.eq.s32.totalorder %s19, 0
      %p75 = por %p73, %p74
      %p76 = scmp.ne.s32.totalorder %s64, %s65
      %p77 = scmp.eq.s32.totalorder %s20, 1
      %p78 = por %p76, %p77
      %p80 = scmp.ne.s32.totalorder %s65, %s79
      %p81 = scmp.eq.s32.totalorder %s20, 0
      %p82 = por %p80, %p81
      %s83 = ssub.s32 %s21, %s33
      %s84 = ssub.s32 %s22, %s29
      %s85 = sor.u32 %s83, %s84
      %p86 = scmp.eq.s32.totalorder %s85, 0
      %s88 = sadd.s32 %s87, 1
      %s89 = scalar_select %p86, %s87, %s88
      %p92 = pneg %p86
      %p93 = scmp.eq.s32.totalorder %s14, 1
      %p94 = por %p92, %p93
      %p95 = scmp.ne.s32.totalorder %s87, %s90
      %p96 = scmp.eq.s32.totalorder %s14, 0
      %p97 = por %p95, %p96
      %p98 = scmp.ne.s32.totalorder %s87, %s90
      %p99 = scmp.eq.s32.totalorder %s19, 1
      %p100 = por %p98, %p99
      %p101 = scmp.ne.s32.totalorder %s90, %s91
      %p102 = scmp.eq.s32.totalorder %s19, 0
      %p103 = por %p101, %p102
      %p104 = scmp.ne.s32.totalorder %s90, %s91
      %p105 = scmp.eq.s32.totalorder %s20, 1
      %p106 = por %p104, %p105
      %p108 = scmp.ne.s32.totalorder %s91, %s107
      %p109 = scmp.eq.s32.totalorder %s20, 0
      %p110 = por %p108, %p109
      %p111 = scmp.le.s32.totalorder 1, %s14
      %p112 = scmp.lt.s32.totalorder %s14, 3
      %p113 = pnand %p111, %p112
      %p114 = pneg %p113
      // Predicated region
      $region9: #{tpu_custom_call.1} parent=5 // pred_check
        _
      $region10: #{tpu_custom_call.1} parent=5 // pred_check_branch
        %116 = sbr.rel (%p113) target = $region12
      $region11: #{tpu_custom_call.1} parent=5 // pred_region
        %s117 = ssub.s32 %s14, 1
        // Predicated region
        $region13: #{tpu_custom_call.1} parent=11 // pred_check
          %p118 = pneg %p75
        $region14: #{tpu_custom_call.1} parent=11 // pred_check_branch
          %120 = sbr.rel (%p118) target = $region16
        $region15: #{tpu_custom_call.1} parent=11 // pred_region
          _
        $region16: #{tpu_custom_call.1} parent=11 // pred_fallthru
          _
      $region12: #{tpu_custom_call.1} parent=5 // pred_fallthru
        _
      %p121 = scmp.lt.s32.totalorder %s14, 2
      // Predicated region
      $region17: #{tpu_custom_call.1} parent=5 // pred_check
        %p122 = pneg %p121
      $region18: #{tpu_custom_call.1} parent=5 // pred_check_branch
        %124 = sbr.rel (%p122) target = $region20
      $region19: #{tpu_custom_call.1} parent=5 // pred_region
        // Predicated region
        $region21: #{tpu_custom_call.1} parent=19 // pred_check
          %p125 = pneg %p48
        $region22: #{tpu_custom_call.1} parent=19 // pred_check_branch
          %127 = sbr.rel (%p125) target = $region24
        $region23: #{tpu_custom_call.1} parent=19 // pred_region
          %s128 = sand.u32 %s38, 1
          %s129 = scalar_lea.sflag [#allocation3], %s128
          %s130 = sand.u32 %s38, 1
          %s131 = smul.addr %s130, 128
          %s132 = scalar_lea.vmem [#allocation2], %s131
          %s133 = smul.u32 2, %s22
          %s135 = ssub.s32 2048, 2048
          %136 = vsyncadd %s129, %s135
          %s137 = smul.addr %s21, 16
          %s138 = sadd.s32 %s133, %s137
          %s139 = smul.addr %s138, 128
          %s140 = scalar_lea.hbm %s0, %s139
          %s141 = sshll.u32 %s132, 4
          %s142 = int_to_ptr.vmem [resolvable:$true] %s141
          %147 = dma.hbm_to_vmem [thread:$0]  %s140, 2048, %s142, %s129, 256, 256, 16
        $region24: #{tpu_custom_call.1} parent=19 // pred_fallthru
          _
      $region20: #{tpu_custom_call.1} parent=5 // pred_fallthru
        _
      %p148 = scmp.le.s32.totalorder 1, %s14
      %p149 = scmp.lt.s32.totalorder %s14, 3
      %p150 = pnand %p148, %p149
      %p151 = pneg %p150
      // Predicated region
      $region25: #{tpu_custom_call.1} parent=5 // pred_check
        _
      $region26: #{tpu_custom_call.1} parent=5 // pred_check_branch
        %153 = sbr.rel (%p150) target = $region28
      $region27: #{tpu_custom_call.1} parent=5 // pred_region
        %s154 = ssub.s32 %s14, 1
        %s155 = sand.u32 %s41, 1
        %s156 = scalar_lea.sflag [#allocation3], %s155
        %s157 = sand.u32 %s41, 1
        %s158 = smul.addr %s157, 128
        %s159 = scalar_lea.vmem [#allocation2], %s158
        // Predicated region
        $region29: #{tpu_custom_call.1} parent=27 // pred_check
          %p160 = pneg %p54
        $region30: #{tpu_custom_call.1} parent=27 // pred_check_branch
          %162 = sbr.rel (%p160) target = $region32
        $region31: #{tpu_custom_call.1} parent=27 // pred_region
          %163 = dma.done %s156, 2048
        $region32: #{tpu_custom_call.1} parent=27 // pred_fallthru
          _
        %s164 = sand.u32 %s41, 1
        %s165 = scalar_lea.sflag [#allocation3], %s164
        %s166 = sand.u32 %s41, 1
        %s167 = smul.addr %s166, 128
        %s168 = scalar_lea.vmem [#allocation2], %s167
        %p169 = pneg %p54
        %p170 = pneg %p51
        %p171 = pneg %p75
        %p172 = pneg %p72
        %p173 = pneg %p103
        %p174 = pneg %p100
        %s175 = sand.u32 %s90, 1
        %s176 = scalar_lea.sflag [#allocation4], %s175
        %s177 = sand.u32 %s90, 1
        %s178 = smul.addr %s177, 128
        %s179 = scalar_lea.vmem [#allocation5], %s178
        %s180 = smul.u32 2, %s24
        %s181 = smul.u32 2, %s24
        %v182 = vld [vmem:[%s159] sm:$0xff]
        %v183 = vld [vmem:[%s159 + $0x8] sm:$0xff]
        %v184 = vld [vmem:[%s159 + $0x10] sm:$0xff]
        %v185 = vld [vmem:[%s159 + $0x18] sm:$0xff]
        %v186 = vld [vmem:[%s159 + $0x20] sm:$0xff]
        %v187 = vld [vmem:[%s159 + $0x28] sm:$0xff]
        %v188 = vld [vmem:[%s159 + $0x30] sm:$0xff]
        %v189 = vld [vmem:[%s159 + $0x38] sm:$0xff]
        %v190 = vld [vmem:[%s159 + $0x40] sm:$0xff]
        %v191 = vld [vmem:[%s159 + $0x48] sm:$0xff]
        %v192 = vld [vmem:[%s159 + $0x50] sm:$0xff]
        %v193 = vld [vmem:[%s159 + $0x58] sm:$0xff]
        %v194 = vld [vmem:[%s159 + $0x60] sm:$0xff]
        %v195 = vld [vmem:[%s159 + $0x68] sm:$0xff]
        %v196 = vld [vmem:[%s159 + $0x70] sm:$0xff]
        %v197 = vld [vmem:[%s159 + $0x78] sm:$0xff]
        %v198 = vadd.f32 %v182, %v184
        %v199 = vadd.f32 %v198, %v186
        %v200 = vadd.f32 %v199, %v188
        %v201 = vadd.f32 %v200, %v190
        %v202 = vadd.f32 %v201, %v192
        %v203 = vadd.f32 %v202, %v194
        %v204 = vadd.f32 %v203, %v196
        %v205 = vrot.slane %v204, 4
        %v206 = vadd.f32 %v204, %v205
        %v207 = vrot.slane %v206, 2
        %v208 = vadd.f32 %v206, %v207
        %v209 = vrot.slane %v208, 1
        %v210 = vadd.f32 %v208, %v209
        %v211 = vadd.f32 %v183, %v185
        %v212 = vadd.f32 %v211, %v187
        %v213 = vadd.f32 %v212, %v189
        %v214 = vadd.f32 %v213, %v191
        %v215 = vadd.f32 %v214, %v193
        %v216 = vadd.f32 %v215, %v195
        %v217 = vadd.f32 %v216, %v197
        %v218 = vrot.slane %v217, 4
        %v219 = vadd.f32 %v217, %v218
        %v220 = vrot.slane %v219, 2
        %v221 = vadd.f32 %v219, %v220
        %v222 = vrot.slane %v221, 1
        %v223 = vadd.f32 %v221, %v222
        %v224 = vrcp.pop 64.0
        %v225 = vmul.f32 %v210, %v224
        %v226 = vmul.f32 %v223, %v224
        %v227 = vsub.f32 %v182, %v225
        %v228 = vsub.f32 %v183, %v226
        %v229 = vsub.f32 %v184, %v225
        %v230 = vsub.f32 %v185, %v226
        %v231 = vsub.f32 %v186, %v225
        %v232 = vsub.f32 %v187, %v226
        %v233 = vsub.f32 %v188, %v225
        %v234 = vsub.f32 %v189, %v226
        %v235 = vsub.f32 %v190, %v225
        %v236 = vsub.f32 %v191, %v226
        %v237 = vsub.f32 %v192, %v225
        %v238 = vsub.f32 %v193, %v226
        %v239 = vsub.f32 %v194, %v225
        %v240 = vsub.f32 %v195, %v226
        %v241 = vsub.f32 %v196, %v225
        %v242 = vsub.f32 %v197, %v226
        %v243 = vmul.f32 %v227, %v227
        %v244 = vmul.f32 %v228, %v228
        %v245 = vmul.f32 %v229, %v229
        %v246 = vmul.f32 %v230, %v230
        %v247 = vmul.f32 %v231, %v231
        %v248 = vmul.f32 %v232, %v232
        %v249 = vmul.f32 %v233, %v233
        %v250 = vmul.f32 %v234, %v234
        %v251 = vmul.f32 %v235, %v235
        %v252 = vmul.f32 %v236, %v236
        %v253 = vmul.f32 %v237, %v237
        %v254 = vmul.f32 %v238, %v238
        %v255 = vmul.f32 %v239, %v239
        %v256 = vmul.f32 %v240, %v240
        %v257 = vmul.f32 %v241, %v241
        %v258 = vmul.f32 %v242, %v242
        %v259 = vadd.f32 %v243, %v245
        %v260 = vadd.f32 %v259, %v247
        %v261 = vadd.f32 %v260, %v249
        %v262 = vadd.f32 %v261, %v251
        %v263 = vadd.f32 %v262, %v253
        %v264 = vadd.f32 %v263, %v255
        %v265 = vadd.f32 %v264, %v257
        %v266 = vrot.slane %v265, 4
        %v267 = vadd.f32 %v265, %v266
        %v268 = vrot.slane %v267, 2
        %v269 = vadd.f32 %v267, %v268
        %v270 = vrot.slane %v269, 1
        %v271 = vadd.f32 %v269, %v270
        %v272 = vadd.f32 %v244, %v246
        %v273 = vadd.f32 %v272, %v248
        %v274 = vadd.f32 %v273, %v250
        %v275 = vadd.f32 %v274, %v252
        %v276 = vadd.f32 %v275, %v254
        %v277 = vadd.f32 %v276, %v256
        %v278 = vadd.f32 %v277, %v258
        %v279 = vrot.slane %v278, 4
        %v280 = vadd.f32 %v278, %v279
        %v281 = vrot.slane %v280, 2
        %v282 = vadd.f32 %v280, %v281
        %v283 = vrot.slane %v282, 1
        %v284 = vadd.f32 %v282, %v283
        %v285 = vmul.f32 %v271, %v224
        %v286 = vmul.f32 %v284, %v224
        %v287 = vadd.f32 %v285, 1e-05
        %v288 = vadd.f32 %v286, 1e-05
        %v289 = vrsqrt.pop %v287
        %v290 = vrsqrt.pop %v288
        %v291 = vmul.f32 %v227, %v289
        %v292 = vmul.f32 %v228, %v290
        %v293 = vmul.f32 %v229, %v289
        %v294 = vmul.f32 %v230, %v290
        %v295 = vmul.f32 %v231, %v289
        %v296 = vmul.f32 %v232, %v290
        %v297 = vmul.f32 %v233, %v289
        %v298 = vmul.f32 %v234, %v290
        %v299 = vmul.f32 %v235, %v289
        %v300 = vmul.f32 %v236, %v290
        %v301 = vmul.f32 %v237, %v289
        %v302 = vmul.f32 %v238, %v290
        %v303 = vmul.f32 %v239, %v289
        %v304 = vmul.f32 %v240, %v290
        %v305 = vmul.f32 %v241, %v289
        %v306 = vmul.f32 %v242, %v290
        %v307 = vld [vmem:[%s1] sm:$0xff]
        %v308 = vld [vmem:[%s1 + $0x8] sm:$0xff]
        %v309 = vld [vmem:[%s1 + $0x10] sm:$0xff]
        %v310 = vld [vmem:[%s1 + $0x18] sm:$0xff]
        %v311 = vld [vmem:[%s1 + $0x20] sm:$0xff]
        %v312 = vld [vmem:[%s1 + $0x28] sm:$0xff]
        %v313 = vld [vmem:[%s1 + $0x30] sm:$0xff]
        %v314 = vld [vmem:[%s1 + $0x38] sm:$0xff]
        %316 = vset.pattern.permute.xlu0 0
        %317 = vperm.xlu0 %316, %v307
        %v318 = vpop.permute.xlu0 %317
        %321 = vset.pattern.permute.xlu0 0
        %322 = vperm.xlu0 %321, %v308
        %v323 = vpop.permute.xlu0 %322
        %326 = vset.pattern.permute.xlu0 0
        %327 = vperm.xlu0 %326, %v309
        %v328 = vpop.permute.xlu0 %327
        %331 = vset.pattern.permute.xlu0 0
        %332 = vperm.xlu0 %331, %v310
        %v333 = vpop.permute.xlu0 %332
        %336 = vset.pattern.permute.xlu0 0
        %337 = vperm.xlu0 %336, %v311
        %v338 = vpop.permute.xlu0 %337
        %341 = vset.pattern.permute.xlu0 0
        %342 = vperm.xlu0 %341, %v312
        %v343 = vpop.permute.xlu0 %342
        %346 = vset.pattern.permute.xlu0 0
        %347 = vperm.xlu0 %346, %v313
        %v348 = vpop.permute.xlu0 %347
        %351 = vset.pattern.permute.xlu0 0
        %352 = vperm.xlu0 %351, %v314
        %v353 = vpop.permute.xlu0 %352
        %v355 = vmul.f32 %v291, %v318
        %v356 = vmul.f32 %v292, %v318
        %v357 = vmul.f32 %v293, %v323
        %v358 = vmul.f32 %v294, %v323
        %v359 = vmul.f32 %v295, %v328
        %v360 = vmul.f32 %v296, %v328
        %v361 = vmul.f32 %v297, %v333
        %v362 = vmul.f32 %v298, %v333
        %v363 = vmul.f32 %v299, %v338
        %v364 = vmul.f32 %v300, %v338
        %v365 = vmul.f32 %v301, %v343
        %v366 = vmul.f32 %v302, %v343
        %v367 = vmul.f32 %v303, %v348
        %v368 = vmul.f32 %v304, %v348
        %v369 = vmul.f32 %v305, %v353
        %v370 = vmul.f32 %v306, %v353
        %371 = vst [vmem:[%s179] sm:$0xff] %v355
        %372 = vst [vmem:[%s179 + $0x8] sm:$0xff] %v356
        %373 = vst [vmem:[%s179 + $0x10] sm:$0xff] %v357
        %374 = vst [vmem:[%s179 + $0x18] sm:$0xff] %v358
        %375 = vst [vmem:[%s179 + $0x20] sm:$0xff] %v359
        %376 = vst [vmem:[%s179 + $0x28] sm:$0xff] %v360
        %377 = vst [vmem:[%s179 + $0x30] sm:$0xff] %v361
        %378 = vst [vmem:[%s179 + $0x38] sm:$0xff] %v362
        %379 = vst [vmem:[%s179 + $0x40] sm:$0xff] %v363
        %380 = vst [vmem:[%s179 + $0x48] sm:$0xff] %v364
        %381 = vst [vmem:[%s179 + $0x50] sm:$0xff] %v365
        %382 = vst [vmem:[%s179 + $0x58] sm:$0xff] %v366
        %383 = vst [vmem:[%s179 + $0x60] sm:$0xff] %v367
        %384 = vst [vmem:[%s179 + $0x68] sm:$0xff] %v368
        %385 = vst [vmem:[%s179 + $0x70] sm:$0xff] %v369
        %386 = vst [vmem:[%s179 + $0x78] sm:$0xff] %v370
        %s387 = sand.u32 %s90, 1
        %s388 = scalar_lea.sflag [#allocation4], %s387
        %s389 = sand.u32 %s90, 1
        %s390 = smul.addr %s389, 128
        %s391 = scalar_lea.vmem [#allocation5], %s390
        // Predicated region
        $region33: #{tpu_custom_call.1} parent=27 // pred_check
          %p392 = pneg %p100
        $region34: #{tpu_custom_call.1} parent=27 // pred_check_branch
          %394 = sbr.rel (%p392) target = $region36
        $region35: #{tpu_custom_call.1} parent=27 // pred_region
          %s395 = smul.u32 2, %s24
          %s397 = ssub.s32 2048, 2048
          %398 = vsyncadd %s388, %s397
          %s399 = smul.addr %s23, 16
          %s400 = sadd.s32 %s395, %s399
          %s401 = smul.addr %s400, 128
          %s402 = scalar_lea.hbm %s2, %s401
          %s403 = sshll.u32 %s391, 4
          %s404 = int_to_ptr.vmem [resolvable:$true] %s403
          %409 = dma.vmem_to_hbm [thread:$0]  %s404, 2048, %s402, %s388, 256, 256, 16
        $region36: #{tpu_custom_call.1} parent=27 // pred_fallthru
          _
      $region28: #{tpu_custom_call.1} parent=5 // pred_fallthru
        _
      %p410 = scmp.le.s32.totalorder 2, %s14
      // Predicated region
      $region37: #{tpu_custom_call.1} parent=5 // pred_check
        %p411 = pneg %p410
      $region38: #{tpu_custom_call.1} parent=5 // pred_check_branch
        %413 = sbr.rel (%p411) target = $region40
      $region39: #{tpu_custom_call.1} parent=5 // pred_region
        %s414 = ssub.s32 %s14, 2
        // Predicated region
        $region41: #{tpu_custom_call.1} parent=39 // pred_check
          %p415 = pneg %p106
        $region42: #{tpu_custom_call.1} parent=39 // pred_check_branch
          %417 = sbr.rel (%p415) target = $region44
        $region43: #{tpu_custom_call.1} parent=39 // pred_region
          %s418 = sand.u32 %s91, 1
          %s419 = scalar_lea.sflag [#allocation4], %s418
          %s420 = sand.u32 %s91, 1
          %s421 = smul.addr %s420, 128
          %s422 = scalar_lea.vmem [#allocation5], %s421
          %423 = dma.done %s419, 2048
        $region44: #{tpu_custom_call.1} parent=39 // pred_fallthru
          _
      $region40: #{tpu_custom_call.1} parent=5 // pred_fallthru
        _
    $region6: #{tpu_custom_call.1} parent=1 // loop_footer
      %s18 = sadd.s32 1, %s14
    $region7: #{tpu_custom_call.1} parent=1 // loop_footer_branch
      %13 = sbr.rel target = $region3
    $region8: #{tpu_custom_call.1} parent=1 // loop_exit
      _
    %424 = vsyncpa [#allocation3], 1
    %s425 = scalar_lea.sflag [#allocation3], 1
    %426 = vsyncpa %s425, 1
    %427 = vsyncpa [#allocation4], 1
    %s428 = scalar_lea.sflag [#allocation4], 1
    %429 = vsyncpa %s428, 1

</llo_original>
